<compile_context>
chip_gen: v6e
topology: v6e:2x2x1
jax: 0.10.0
libtpu: 0.0.40
codegen_flags: <defaults>
</compile_context>

<pallas_src>
import jax
import jax.numpy as jnp
from jax.experimental import pallas as pl
from jax.experimental.pallas import tpu as pltpu

N_MAX_POSITIONS = 1024

_LANE = 128
_MIB = 1024 * 1024
# x/out block byte target: 2 streams x 2 buffers x 2 MiB = 8 MiB, safe under
# v5e's 16 MiB default scoped VMEM and near HBM roofline on all generations.
_BLOCK_BYTES_TARGET = 2 * _MIB
# Resident-PE-table budget for the gather path (v7x has only 64 MiB physical VMEM).
_PE_TABLE_VMEM_BUDGET = 12 * _MIB


def _round_up(n, m):
    return ((n + m - 1) // m) * m


# ---------------------------------------------------------------------------
# Kernels
# ---------------------------------------------------------------------------

def _add_flat_kernel(x_ref, pe_ref, out_ref):
    # x_ref/out_ref: (TB, COLS) block of the (B, S*D)-flattened tensor.
    # pe_ref: (1, COLS) block of the (1, max_len*D)-flattened PE table,
    #         broadcast over the batch (sublane) axis.
    out_ref[...] = x_ref[...].astype(out_ref.dtype) + pe_ref[...]


def _add_seqfirst_kernel(x_ref, pe_ref, out_ref):
    # x_ref/out_ref: (TS, B, D) block; pe_ref: (TS, D), broadcast over batch.
    out_ref[...] = x_ref[...].astype(out_ref.dtype) + pe_ref[...][:, None, :]


def _make_gather_kernel(seq_len, tile_s, pos_is_2d):
    """Explicit-positions path: PE table resident in VMEM, rows gathered in-VMEM."""

    def kernel(pos_ref, x_ref, pe_ref, out_ref, gathered):
        # pos_ref: SMEM int32, (B, S) or (S,) (scalar-prefetched)
        # x_ref/out_ref: (1, TS, D) VMEM blocks
        # pe_ref: (max_len, D), resident in VMEM (constant block index)
        # gathered: (TS, D) VMEM scratch (persists across grid steps)
        t = pl.program_id(0)
        b = pl.program_id(1)
        base = t * tile_s

        def gather_rows():
            @pl.loop(0, tile_s)
            def _(i):
                s = jnp.minimum(base + i, seq_len - 1)     # ragged-tail clamp
                p = pos_ref[b, s] if pos_is_2d else pos_ref[s]
                gathered[pl.ds(i, 1), :] = pe_ref[pl.ds(p, 1), :]

        if pos_is_2d:
            gather_rows()
        else:
            # Shared positions: batch axis is innermost and the scratch persists
            # across grid steps, so gather only once per sequence tile.
            @pl.when(b == 0)
            def _():
                gather_rows()

        out_ref[0] = x_ref[0].astype(out_ref.dtype) + gathered[...]

    return kernel


# ---------------------------------------------------------------------------
# Forward paths
# ---------------------------------------------------------------------------

def _forward_batchfirst_arange(x, pe_cast, out_dtype):
    """positions=None, x: [B, S, D]. Lane-dense flattened add (gather-free)."""
    B, S, D = x.shape
    max_len = pe_cast.shape[0]
    total_cols = S * D
    itemsize = max(jnp.dtype(x.dtype).itemsize, jnp.dtype(out_dtype).itemsize)

    # Batch rows per block: full B (simple, PE reuse unaffected) unless huge.
    tb = B if B <= 256 else 256                       # 256 is a multiple of 8

    # Lane-dense column tile: multiple of 128, ~2 MiB per x block.
    cols = max(_LANE, (_BLOCK_BYTES_TARGET // (tb * itemsize)) // _LANE * _LANE)
    cols = min(cols, _round_up(total_cols, _LANE))

    x_flat = x.reshape(B, total_cols)                 # free reshape (contiguous)
    pe_flat = pe_cast.reshape(1, max_len * D)         # free reshape, no slice/copy

    pad_cols = 0
    if total_cols < cols:                             # tiny-sequence edge case only
        pad_cols = cols - total_cols
        x_flat = jnp.pad(x_flat, ((0, 0), (0, pad_cols)))

    n_col_tiles = pl.cdiv(x_flat.shape[1], cols)
    n_b_tiles = pl.cdiv(B, tb)

    out = pl.pallas_call(
        _add_flat_kernel,
        out_shape=jax.ShapeDtypeStruct((B, x_flat.shape[1]), out_dtype),
        grid_spec=pl.GridSpec(
            grid=(n_col_tiles, n_b_tiles),            # batch innermost -> PE tile reused
            in_specs=[
                pl.BlockSpec((tb, cols), lambda t, b: (b, t)),
                pl.BlockSpec((1, cols), lambda t, b: (0, t)),
            ],
            out_specs=pl.BlockSpec((tb, cols), lambda t, b: (b, t)),
        ),
        compiler_params=pltpu.CompilerParams(
            dimension_semantics=("parallel", "parallel")),
    )(x_flat, pe_flat)

    if pad_cols:
        out = out[:, :total_cols]
    return out.reshape(B, S, D)


def _forward_seqfirst_arange(x, pe_cast, out_dtype):
    """positions=None, x: [S, B, D] handled natively (no wrapper transpose)."""
    S, B, D = x.shape
    itemsize = max(jnp.dtype(x.dtype).itemsize, jnp.dtype(out_dtype).itemsize)
    row_bytes = B * D * itemsize                      # bytes per sequence row of a block

    if 8 * row_bytes * 4 > 40 * _MIB:
        # TODO(synk): extremely wide [S, B, D] inputs fall back to a wrapper
        #             transpose (one extra HBM pass) to keep blocks VMEM-sized.
        out = _forward_batchfirst_arange(jnp.transpose(x, (1, 0, 2)), pe_cast, out_dtype)
        return jnp.transpose(out, (1, 0, 2))

    ts = max(8, (_BLOCK_BYTES_TARGET // row_bytes) // 8 * 8)
    ts = min(ts, _round_up(S, 8))
    # TODO(synk): for B below the sublane pack this layout under-fills vregs; a
    #             lane-folded variant would be faster but is not needed here.

    return pl.pallas_call(
        _add_seqfirst_kernel,
        out_shape=jax.ShapeDtypeStruct((S, B, D), out_dtype),
        grid_spec=pl.GridSpec(
            grid=(pl.cdiv(S, ts),),
            in_specs=[
                pl.BlockSpec((ts, B, D), lambda t: (t, 0, 0)),
                pl.BlockSpec((ts, D), lambda t: (t, 0)),
            ],
            out_specs=pl.BlockSpec((ts, B, D), lambda t: (t, 0, 0)),
        ),
        compiler_params=pltpu.CompilerParams(dimension_semantics=("parallel",)),
    )(x, pe_cast)


def _forward_with_positions(x, pe_cast, positions, out_dtype):
    """Explicit positions, x: [B, S, D]. Resident-table in-VMEM gather + add."""
    B, S, D = x.shape
    max_len = pe_cast.shape[0]
    itemsize = jnp.dtype(out_dtype).itemsize
    table_bytes = max_len * D * itemsize

    if table_bytes > _PE_TABLE_VMEM_BUDGET and D > _LANE:
        # TODO(synk): oversized PE tables are split along D in the wrapper
        #             (extra slice/concat HBM passes); rare for max_len=1024.
        dc = max(_LANE, (_PE_TABLE_VMEM_BUDGET // (max_len * itemsize)) // _LANE * _LANE)
        parts = [
            _forward_with_positions(x[..., lo:lo + dc], pe_cast[:, lo:lo + dc],
                                    positions, out_dtype)
            for lo in range(0, D, dc)
        ]
        return jnp.concatenate(parts, axis=-1)

    pos_is_2d = positions.ndim == 2

    # Sequence rows per tile (sublane-aligned); modest since the table is resident.
    ts = max(8, (_MIB // max(1, D * itemsize)) // 8 * 8)
    ts = min(ts, _round_up(S, 8), 512)

    x_block_bytes = ts * D * max(itemsize, jnp.dtype(x.dtype).itemsize)
    vmem_limit = int(min(
        48 * _MIB,
        max(24 * _MIB,
            table_bytes + 4 * x_block_bytes + ts * D * itemsize + 4 * _MIB)))

    kernel = _make_gather_kernel(S, ts, pos_is_2d)

    return pl.pallas_call(
        kernel,
        out_shape=jax.ShapeDtypeStruct((B, S, D), out_dtype),
        grid_spec=pltpu.PrefetchScalarGridSpec(
            num_scalar_prefetch=1,
            grid=(pl.cdiv(S, ts), B),                 # batch innermost
            in_specs=[
                pl.BlockSpec((1, ts, D), lambda t, b, pos: (b, t, 0)),
                # Whole PE table resident in VMEM (constant block index => one DMA).
                pl.BlockSpec((max_len, D), lambda t, b, pos: (0, 0)),
            ],
            out_specs=pl.BlockSpec((1, ts, D), lambda t, b, pos: (b, t, 0)),
            scratch_shapes=[pltpu.VMEM((ts, D), out_dtype)],
        ),
        compiler_params=pltpu.CompilerParams(
            dimension_semantics=("parallel", "arbitrary"),
            vmem_limit_bytes=vmem_limit),
    )(positions, x, pe_cast)


# ---------------------------------------------------------------------------
# Public wrapper
# ---------------------------------------------------------------------------

def learnable_pe_forward(x, pe_table, positions=None, batch_first=True):
    """Pallas implementation of LearnablePE.forward (eval mode: dropout = identity).

    x: [B, S, D] if batch_first else [S, B, D]; pe_table: [max_len, D].
    positions: optional int array of shape [S], [1, S] or [B, S].
    Out-of-range positions are clamped (PyTorch would raise instead).
    """
    max_len, d_model = pe_table.shape
    if batch_first:
        B, S, D = x.shape
    else:
        S, B, D = x.shape
    assert D == d_model, "embedding dim mismatch with PE table"
    assert S <= max_len, "sequence length exceeds PE table size"

    # Match torch type promotion for `x + pe`.
    out_dtype = jnp.promote_types(x.dtype, pe_table.dtype)
    pe_cast = pe_table.astype(out_dtype)

    if positions is None:
        if batch_first:
            return _forward_batchfirst_arange(x, pe_cast, out_dtype)
        return _forward_seqfirst_arange(x, pe_cast, out_dtype)

    positions = jnp.clip(positions.astype(jnp.int32), 0, max_len - 1)
    if positions.ndim == 2 and positions.shape[0] == 1:
        positions = positions[0]          # shared positions -> 1-D (gather once per tile)

    if not batch_first:
        # TODO(synk): seq-first with explicit positions uses a wrapper transpose
        #             (one extra HBM pass each way).
        out = _forward_with_positions(
            jnp.transpose(x, (1, 0, 2)), pe_cast, positions, out_dtype)
        return jnp.transpose(out, (1, 0, 2))

    return _forward_with_positions(x, pe_cast, positions, out_dtype)


if __name__ == "__main__":
    B, S, D = 2, 8, 32
    key = jax.random.PRNGKey(0)
    kx, kpe, kpos = jax.random.split(key, 3)

    x = jax.random.normal(kx, (B, S, D), dtype=jnp.float32)
    # Embedding init: normal(0, d_model**-0.5), deterministic in-script.
    pe_table = (D ** -0.5) * jax.random.normal(
        kpe, (N_MAX_POSITIONS, D), dtype=jnp.float32)

    # 1) positions=None, batch_first=True (lane-dense flattened fast path).
    out = jax.block_until_ready(learnable_pe_forward(x, pe_table))
    ref = x + pe_table[jnp.arange(S)][None, :, :]
    assert out.shape == (B, S, D) and out.dtype == ref.dtype
    assert jnp.allclose(out, ref, atol=1e-6), "fast-path mismatch vs reference"

    # 2) positions=None, batch_first=False (native [S, B, D], no wrapper transpose).
    x_sf = jnp.transpose(x, (1, 0, 2))
    out_sf = jax.block_until_ready(
        learnable_pe_forward(x_sf, pe_table, batch_first=False))
    assert jnp.allclose(out_sf, jnp.transpose(ref, (1, 0, 2)), atol=1e-6), \
        "seq-first mismatch vs reference"

    # 3) arbitrary per-batch positions (resident-table in-VMEM gather path).
    positions = jax.random.randint(kpos, (B, S), 0, N_MAX_POSITIONS, dtype=jnp.int32)
    out_g = jax.block_until_ready(
        learnable_pe_forward(x, pe_table, positions=positions))
    assert jnp.allclose(out_g, x + pe_table[positions], atol=1e-6), \
        "gather-path (2-D positions) mismatch vs reference"

    # 4) shared positions, shape (1, S) like the torch default path (gather once/tile).
    pos_shared = jnp.arange(S, dtype=jnp.int32)[::-1][None, :]
    out_s = jax.block_until_ready(
        learnable_pe_forward(x, pe_table, positions=pos_shared))
    assert jnp.allclose(out_s, x + pe_table[pos_shared[0]][None, :, :], atol=1e-6), \
        "gather-path (shared positions) mismatch vs reference"

    print("KERNEL_OK")
</pallas_src>

<mosaic_0001>
module attributes {stable_mosaic.version = 11 : i64} {
  func.func @_add_flat_kernel(%arg0: i32, %arg1: i32, %arg2: memref<2x256xf32, #tpu.memory_space<vmem>>, %arg3: memref<1x256xf32, #tpu.memory_space<vmem>>, %arg4: memref<2x256xf32, #tpu.memory_space<vmem>>) attributes {dimension_semantics = [#tpu.dimension_semantics<parallel>, #tpu.dimension_semantics<parallel>], iteration_bounds = array<i64: 1, 1>, scalar_prefetch = 0 : i64, scratch_operands = 0 : i64, tpu.core_type = #tpu.core_type<tc>, window_params = [{transform_indices = @transform_0, window_bounds = array<i64: 2, 256>}, {transform_indices = @transform_1, window_bounds = array<i64: 1, 256>}, {transform_indices = @transform_2, window_bounds = array<i64: 2, 256>}]} {
    %c0 = arith.constant 0 : index
    %c0_0 = arith.constant 0 : index
    %0 = vector.load %arg2[%c0, %c0_0] : memref<2x256xf32, #tpu.memory_space<vmem>>, vector<2x256xf32>
    %c0_1 = arith.constant 0 : index
    %c0_2 = arith.constant 0 : index
    %1 = vector.load %arg3[%c0_1, %c0_2] : memref<1x256xf32, #tpu.memory_space<vmem>>, vector<1x256xf32>
    %2 = vector.broadcast %1 : vector<1x256xf32> to vector<2x256xf32>
    %3 = arith.addf %0, %2 : vector<2x256xf32>
    %c0_3 = arith.constant 0 : index
    %c0_4 = arith.constant 0 : index
    %4 = vector.load %arg4[%c0_3, %c0_4] : memref<2x256xf32, #tpu.memory_space<vmem>>, vector<2x256xf32>
    tpu.vector_store %arg4[%c0_3, %c0_4], %3 {strides = array<i32>} : memref<2x256xf32, #tpu.memory_space<vmem>>, vector<2x256xf32>,
    return
  }
  func.func @transform_0(%arg0: i32, %arg1: i32) -> (i32, i32) {
    %c0_i32 = arith.constant 0 : i32
    return %arg1, %arg0 : i32, i32
  }
  func.func @transform_1(%arg0: i32, %arg1: i32) -> (i32, i32) {
    %c0_i32 = arith.constant 0 : i32
    %c0_i32_0 = arith.constant 0 : i32
    return %c0_i32, %arg0 : i32, i32
  }
  func.func @transform_2(%arg0: i32, %arg1: i32) -> (i32, i32) {
    %c0_i32 = arith.constant 0 : i32
    return %arg1, %arg0 : i32, i32
  }
}

</mosaic_0001>

<llo_original>
// kernel: tpu_custom_call.1
$region0: #{tpu_custom_call.1}
  #allocation0 [shape = 'u32[]', space=smem, size = 0x4, offset = 0x4, fixed_abs, tag = 'smem constant byte address 0x4 - core index']
  #allocation1 [shape = 'u32[144,128]{1,0:T(1,128)}', space=vmem, size = 0x12000, scoped, tag = 'internal scratch']
  %s0 = inlined_call_operand.hbm [shape: f32[2,256], index: 0, kind: input, shape index: {}]
  %s1 = inlined_call_operand.hbm [shape: f32[1,32768], index: 1, kind: input, shape index: {}]
  %s2 = inlined_call_operand.hbm [shape: f32[2,256], index: 2, kind: output, shape index: {}]
  %s3 = sld [smem:[#allocation0]]
  $region26: #{tpu_custom_call.1} parent=0
    _
  %s5 = ssub.s32 1, %s3
  %s6 = scalar_select 0, %s5, %s3
  $region1: #{tpu_custom_call.1} parent=0
    #allocation2 [shape = 'u8[2048]{0}', space=vmem, size = 0x800, scoped, tag = 'input window, operand 0, single buffered']
    #allocation3 [shape = 's32[1]{0}', space=sflag, size = 0x4, scoped, tag = 'scoped memory for tpu_custom_call.1']
    #allocation4 [shape = 's32[1]{0}', space=sflag, size = 0x4, scoped, tag = 'scoped memory for tpu_custom_call.1']
    #allocation5 [shape = 'u8[1024]{0}', space=vmem, size = 0x400, scoped, tag = 'input window, operand 1, single buffered']
    #allocation6 [shape = 's32[1]{0}', space=sflag, size = 0x4, scoped, tag = 'scoped memory for tpu_custom_call.1']
    #allocation7 [shape = 'u8[2048]{0}', space=vmem, size = 0x800, scoped, tag = 'output window, operand 0, single buffered']
    %7 = vsyncpa [#allocation3], 0
    %8 = vsyncpa [#allocation6], 0
    %9 = vsyncpa [#allocation4], 0
    // Predicated region
    $region2: #{tpu_custom_call.1} parent=1 // pred_check
      _
    $region3: #{tpu_custom_call.1} parent=1 // pred_check_branch
      %11 = sbr.rel (0) target = $region5
    $region4: #{tpu_custom_call.1} parent=1 // pred_region
      %s13 = ssub.s32 64, 64
      %14 = vsyncadd [#allocation3], %s13
      %s16 = sshll.u32 [#allocation2], 4
      %s17 = int_to_ptr.vmem [resolvable:$true] %s16
      %19 = dma.hbm_to_vmem [thread:$0]  %s0, 64, %s17, [#allocation3]
    $region5: #{tpu_custom_call.1} parent=1 // pred_fallthru
      _
    // Predicated region
    $region6: #{tpu_custom_call.1} parent=1 // pred_check
      _
    $region7: #{tpu_custom_call.1} parent=1 // pred_check_branch
      %21 = sbr.rel (0) target = $region9
    $region8: #{tpu_custom_call.1} parent=1 // pred_region
      %s23 = ssub.s32 32, 32
      %24 = vsyncadd [#allocation6], %s23
      %s26 = sshll.u32 [#allocation5], 4
      %s27 = int_to_ptr.vmem [resolvable:$true] %s26
      %29 = dma.hbm_to_vmem [thread:$0]  %s1, 32, %s27, [#allocation6]
    $region9: #{tpu_custom_call.1} parent=1 // pred_fallthru
      _
    // Predicated region
    $region10: #{tpu_custom_call.1} parent=1 // pred_check
      _
    $region11: #{tpu_custom_call.1} parent=1 // pred_check_branch
      %31 = sbr.rel (0) target = $region13
    $region12: #{tpu_custom_call.1} parent=1 // pred_region
      %32 = dma.done [#allocation3], 64
    $region13: #{tpu_custom_call.1} parent=1 // pred_fallthru
      _
    // Predicated region
    $region14: #{tpu_custom_call.1} parent=1 // pred_check
      _
    $region15: #{tpu_custom_call.1} parent=1 // pred_check_branch
      %34 = sbr.rel (0) target = $region17
    $region16: #{tpu_custom_call.1} parent=1 // pred_region
      %35 = dma.done [#allocation6], 32
    $region17: #{tpu_custom_call.1} parent=1 // pred_fallthru
      _
    %v36 = vld [vmem:[#allocation2] sm:$0xf]
    %v37 = vld [vmem:[#allocation5] sm:$0x3]
    %v39 = vlaneseq
    %v40 = vshrl.u32 %v39, 7
    %v41 = vsub.s32 0, %v40
    %v42 = vrot.slane %v37, %v41
    %v43 = vlaneseq
    %v44 = vshrl.u32 %v43, 7
    %v45 = vsub.s32 1, %v44
    %v46 = vrot.slane %v37, %v45
    %v47 = vcombine.low %v42, %v46
    %v49 = vunpack.c.l.s4 1983009808
    %v50 = vunpack.c.0.s8 %v49
    %v51 = vlaneseq
    %v52 = vshrl.u32 %v51, 7
    %v53 = vsub.s32 %v50, %v52
    %v54 = vrot.slane %v47, %v53
    %v56 = vadd.f32 %v36, %v54
    %57 = vst [vmem:[#allocation7] sm:$0xf] %v56
    // Predicated region
    $region18: #{tpu_custom_call.1} parent=1 // pred_check
      _
    $region19: #{tpu_custom_call.1} parent=1 // pred_check_branch
      %59 = sbr.rel (0) target = $region21
    $region20: #{tpu_custom_call.1} parent=1 // pred_region
      %s61 = ssub.s32 64, 64
      %62 = vsyncadd [#allocation4], %s61
      %s64 = sshll.u32 [#allocation7], 4
      %s65 = int_to_ptr.vmem [resolvable:$true] %s64
      %67 = dma.vmem_to_hbm [thread:$0]  %s65, 64, %s2, [#allocation4]
    $region21: #{tpu_custom_call.1} parent=1 // pred_fallthru
      _
    // Predicated region
    $region22: #{tpu_custom_call.1} parent=1 // pred_check
      _
    $region23: #{tpu_custom_call.1} parent=1 // pred_check_branch
      %69 = sbr.rel (0) target = $region25
    $region24: #{tpu_custom_call.1} parent=1 // pred_region
      %70 = dma.done [#allocation4], 64
    $region25: #{tpu_custom_call.1} parent=1 // pred_fallthru
      _
    %71 = vsyncpa [#allocation3], 1
    %72 = vsyncpa [#allocation6], 1
    %73 = vsyncpa [#allocation4], 1

</llo_original>
